<compile_context>
chip_gen: v7x
topology: tpu7x:2x2x1
jax: 0.10.0
libtpu: 0.0.40
codegen_flags: <defaults>
</compile_context>

<pallas_src>
import functools

import jax
import jax.numpy as jnp
from jax.experimental import pallas as pl
from jax.experimental.pallas import tpu as pltpu


_LANES = 128
_MAX_TILE_ROWS = 2048  # 2048 * 128 * 4 B = 1 MiB per input per pipeline buffer


def _partial_sums_kernel(p_ref, t_ref, ssq_ref, bce_ref, *,
                         tile_r, n_valid, need_mask, sub):
    """Per-(batch, row-tile) partial sums of (p-t)^2 and the BCE terms.

    p_ref / t_ref : (tile_r, 128) channel-0 tile in native dtype.
    ssq_ref / bce_ref : (sub, 128) f32 per-tile partial-sum outputs.
    """
    p = p_ref[...].astype(jnp.float32)
    t = t_ref[...].astype(jnp.float32)

    diff = p - t
    sq = diff * diff

    # PyTorch binary_cross_entropy clamps the log terms at -100.
    log_p = jnp.maximum(jnp.log(p), -100.0)
    log_1mp = jnp.maximum(jnp.log(1.0 - p), -100.0)
    bce = -(t * log_p + (1.0 - t) * log_1mp)

    if need_mask:
        # Mask rows/lanes of the trailing (partial) tile that lie past the
        # valid element count of this batch block.  jnp.where selects (does not
        # multiply), so any NaN/Inf from out-of-range garbage is discarded.
        r_idx = pl.program_id(1)
        row = jax.lax.broadcasted_iota(jnp.int32, (tile_r, _LANES), 0)
        lane = jax.lax.broadcasted_iota(jnp.int32, (tile_r, _LANES), 1)
        elem = (r_idx * tile_r + row) * _LANES + lane
        valid = elem < n_valid
        sq = jnp.where(valid, sq, 0.0)
        bce = jnp.where(valid, bce, 0.0)

    if sub == 8:
        # (tile_r,128) -> (tile_r//8, 8, 128) groups whole f32 vregs; the axis-0
        # sum is a pure-VPU vreg add tree (no cross-lane/sublane XLU work in the
        # hot loop), and gives tree-like accumulation accuracy.
        ssq_ref[...] = sq.reshape(tile_r // 8, 8, _LANES).sum(axis=0)
        bce_ref[...] = bce.reshape(tile_r // 8, 8, _LANES).sum(axis=0)
    else:
        # Tiny tiles (tile_r not a multiple of 8): plain sublane reduce once.
        ssq_ref[...] = sq.sum(axis=0, keepdims=True)
        bce_ref[...] = bce.sum(axis=0, keepdims=True)


def _partial_sums(p4, t4, n_valid_block):
    """p4/t4: (B', C', R, 128); reduces channel 0 per batch, tiled over rows."""
    b4, _, r_rows, lanes = p4.shape
    assert lanes == _LANES
    tile_r = r_rows if r_rows <= _MAX_TILE_ROWS else _MAX_TILE_ROWS
    num_t = pl.cdiv(r_rows, tile_r)
    need_mask = (num_t * tile_r * _LANES) != n_valid_block
    sub = 8 if tile_r % 8 == 0 else 1

    kernel = functools.partial(
        _partial_sums_kernel,
        tile_r=tile_r, n_valid=n_valid_block, need_mask=need_mask, sub=sub)

    # Channel-0 selection fused into the DMA: index_map pins dim 1 to 0, so only
    # channel 0 is ever read from HBM.
    in_spec = pl.BlockSpec((None, None, tile_r, _LANES),
                           lambda b, r: (b, 0, r, 0))
    out_spec = pl.BlockSpec((None, None, sub, _LANES),
                            lambda b, r: (b, r, 0, 0))

    return pl.pallas_call(
        kernel,
        out_shape=(
            jax.ShapeDtypeStruct((b4, num_t, sub, _LANES), jnp.float32),
            jax.ShapeDtypeStruct((b4, num_t, sub, _LANES), jnp.float32),
        ),
        grid=(b4, num_t),
        in_specs=[in_spec, in_spec],
        out_specs=(out_spec, out_spec),
        compiler_params=pltpu.CompilerParams(
            dimension_semantics=("parallel", "parallel"),
            vmem_limit_bytes=32 * 1024 * 1024,
        ),
    )(p4, t4)


def shape_aware_loss(y_pred, y_true):
    """y_pred, y_true: (B, C, H, W) float arrays; returns scalar f32 loss."""
    assert y_pred.shape == y_true.shape
    b, c, h, w = y_pred.shape
    hw = h * w
    n = b * hw

    if hw % _LANES == 0:
        # Fused path: metadata-only reshape, native dtype, no HBM copies.
        r_rows = hw // _LANES
        p4 = y_pred.reshape(b, c, r_rows, _LANES)
        t4 = y_true.reshape(b, c, r_rows, _LANES)
        ssq_p, bce_p = _partial_sums(p4, t4, n_valid_block=hw)
    else:
        # Fallback for lane-unaligned H*W: materialize channel-0 slice + pad.
        pad = (-n) % _LANES
        p_flat = jnp.pad(y_pred[:, 0].reshape(-1), (0, pad))
        t_flat = jnp.pad(y_true[:, 0].reshape(-1), (0, pad))
        r_rows = (n + pad) // _LANES
        p4 = p_flat.reshape(1, 1, r_rows, _LANES)
        t4 = t_flat.reshape(1, 1, r_rows, _LANES)
        ssq_p, bce_p = _partial_sums(p4, t4, n_valid_block=n)

    # Tiny finalize in plain JAX (keeps both grid axes 'parallel' for megacore).
    ssq = jnp.sum(ssq_p)
    ce = jnp.sum(bce_p) / jnp.float32(n)
    dist = jnp.sqrt(ssq) / 256.0
    return ce + dist * ce


def shape_aware_loss_ref(y_pred, y_true):
    """Pure-JAX reference mirroring the PyTorch module."""
    p = y_pred[:, 0].reshape(-1).astype(jnp.float32)
    t = y_true[:, 0].reshape(-1).astype(jnp.float32)
    dist = jnp.sqrt(jnp.sum((p - t) ** 2)) / 256.0
    log_p = jnp.maximum(jnp.log(p), -100.0)
    log_1mp = jnp.maximum(jnp.log(1.0 - p), -100.0)
    ce = jnp.mean(-(t * log_p + (1.0 - t) * log_1mp))
    return ce + dist * ce


if __name__ == "__main__":
    key = jax.random.PRNGKey(0)
    k1, k2 = jax.random.split(key)
    B, C, H, W = 2, 4, 16, 16

    # y_pred must be probabilities in (0, 1) for BCE; y_true in [0, 1].
    y_pred = jax.nn.sigmoid(jax.random.normal(k1, (B, C, H, W), jnp.float32))
    y_true = (jax.random.uniform(k2, (B, C, H, W), jnp.float32) > 0.5).astype(
        jnp.float32
    )

    loss = jax.block_until_ready(shape_aware_loss(y_pred, y_true))
    ref = jax.block_until_ready(shape_aware_loss_ref(y_pred, y_true))

    assert jnp.allclose(loss, ref, rtol=1e-5, atol=1e-6), (loss, ref)
    print("KERNEL_OK")
</pallas_src>

<mosaic_0001>
module attributes {stable_mosaic.version = 11 : i64} {
  func.func @_partial_sums_kernel(%arg0: i32, %arg1: i32, %arg2: memref<1x1x2x128xf32, #tpu.memory_space<vmem>>, %arg3: memref<1x1x2x128xf32, #tpu.memory_space<vmem>>, %arg4: memref<1x1x1x128xf32, #tpu.memory_space<vmem>>, %arg5: memref<1x1x1x128xf32, #tpu.memory_space<vmem>>) attributes {dimension_semantics = [#tpu.dimension_semantics<parallel>, #tpu.dimension_semantics<parallel>], iteration_bounds = array<i64: 2, 1>, scalar_prefetch = 0 : i64, scratch_operands = 0 : i64, tpu.core_type = #tpu.core_type<tc>, window_params = [{transform_indices = @transform_0, window_bounds = array<i64: 1, 1, 2, 128>}, {transform_indices = @transform_1, window_bounds = array<i64: 1, 1, 2, 128>}, {transform_indices = @transform_2, window_bounds = array<i64: 1, 1, 1, 128>}, {transform_indices = @transform_3, window_bounds = array<i64: 1, 1, 1, 128>}]} {
    %c0 = arith.constant 0 : index
    %c0_0 = arith.constant 0 : index
    %c0_1 = arith.constant 0 : index
    %c0_2 = arith.constant 0 : index
    %0 = vector.load %arg2[%c0, %c0_0, %c0_1, %c0_2] : memref<1x1x2x128xf32, #tpu.memory_space<vmem>>, vector<1x1x2x128xf32>
    %1 = vector.shape_cast %0 : vector<1x1x2x128xf32> to vector<2x128xf32>
    %c0_3 = arith.constant 0 : index
    %c0_4 = arith.constant 0 : index
    %c0_5 = arith.constant 0 : index
    %c0_6 = arith.constant 0 : index
    %2 = vector.load %arg3[%c0_3, %c0_4, %c0_5, %c0_6] : memref<1x1x2x128xf32, #tpu.memory_space<vmem>>, vector<1x1x2x128xf32>
    %3 = vector.shape_cast %2 : vector<1x1x2x128xf32> to vector<2x128xf32>
    %4 = arith.subf %1, %3 : vector<2x128xf32>
    %5 = arith.mulf %4, %4 : vector<2x128xf32>
    %6 = math.log %1 : vector<2x128xf32>
    %cst = arith.constant -1.000000e+02 : f32
    %7 = vector.broadcast %cst : f32 to vector<2x128xf32>
    %8 = arith.maximumf %6, %7 : vector<2x128xf32>
    %cst_7 = arith.constant 1.000000e+00 : f32
    %9 = vector.broadcast %cst_7 : f32 to vector<2x128xf32>
    %10 = arith.subf %9, %1 : vector<2x128xf32>
    %11 = math.log %10 : vector<2x128xf32>
    %cst_8 = arith.constant -1.000000e+02 : f32
    %12 = vector.broadcast %cst_8 : f32 to vector<2x128xf32>
    %13 = arith.maximumf %11, %12 : vector<2x128xf32>
    %14 = arith.mulf %3, %8 : vector<2x128xf32>
    %cst_9 = arith.constant 1.000000e+00 : f32
    %15 = vector.broadcast %cst_9 : f32 to vector<2x128xf32>
    %16 = arith.subf %15, %3 : vector<2x128xf32>
    %17 = arith.mulf %16, %13 : vector<2x128xf32>
    %18 = arith.addf %14, %17 : vector<2x128xf32>
    %cst_10 = arith.constant 0.000000e+00 : f32
    %19 = vector.broadcast %cst_10 : f32 to vector<2x128xf32>
    %20 = arith.subf %19, %18 : vector<2x128xf32>
    %cst_11 = arith.constant dense<0.000000e+00> : vector<128xf32>
    %21 = vector.multi_reduction <add>, %5, %cst_11 [0] : vector<2x128xf32> to vector<128xf32>
    %22 = vector.shape_cast %21 : vector<128xf32> to vector<1x128xf32>
    %c0_12 = arith.constant 0 : index
    %c0_13 = arith.constant 0 : index
    %c0_14 = arith.constant 0 : index
    %c0_15 = arith.constant 0 : index
    %23 = vector.load %arg4[%c0_12, %c0_13, %c0_14, %c0_15] : memref<1x1x1x128xf32, #tpu.memory_space<vmem>>, vector<1x1x1x128xf32>
    %24 = vector.shape_cast %23 : vector<1x1x1x128xf32> to vector<1x128xf32>
    %25 = vector.shape_cast %22 : vector<1x128xf32> to vector<1x1x1x128xf32>
    tpu.vector_store %arg4[%c0_12, %c0_13, %c0_14, %c0_15], %25 {strides = array<i32>} : memref<1x1x1x128xf32, #tpu.memory_space<vmem>>, vector<1x1x1x128xf32>,
    %cst_16 = arith.constant dense<0.000000e+00> : vector<128xf32>
    %26 = vector.multi_reduction <add>, %20, %cst_16 [0] : vector<2x128xf32> to vector<128xf32>
    %27 = vector.shape_cast %26 : vector<128xf32> to vector<1x128xf32>
    %c0_17 = arith.constant 0 : index
    %c0_18 = arith.constant 0 : index
    %c0_19 = arith.constant 0 : index
    %c0_20 = arith.constant 0 : index
    %28 = vector.load %arg5[%c0_17, %c0_18, %c0_19, %c0_20] : memref<1x1x1x128xf32, #tpu.memory_space<vmem>>, vector<1x1x1x128xf32>
    %29 = vector.shape_cast %28 : vector<1x1x1x128xf32> to vector<1x128xf32>
    %30 = vector.shape_cast %27 : vector<1x128xf32> to vector<1x1x1x128xf32>
    tpu.vector_store %arg5[%c0_17, %c0_18, %c0_19, %c0_20], %30 {strides = array<i32>} : memref<1x1x1x128xf32, #tpu.memory_space<vmem>>, vector<1x1x1x128xf32>,
    return
  }
  func.func @transform_0(%arg0: i32, %arg1: i32) -> (i32, i32, i32, i32) {
    %c0_i32 = arith.constant 0 : i32
    %c0_i32_0 = arith.constant 0 : i32
    %c0_i32_1 = arith.constant 0 : i32
    return %arg0, %c0_i32, %arg1, %c0_i32_0 : i32, i32, i32, i32
  }
  func.func @transform_1(%arg0: i32, %arg1: i32) -> (i32, i32, i32, i32) {
    %c0_i32 = arith.constant 0 : i32
    %c0_i32_0 = arith.constant 0 : i32
    %c0_i32_1 = arith.constant 0 : i32
    return %arg0, %c0_i32, %arg1, %c0_i32_0 : i32, i32, i32, i32
  }
  func.func @transform_2(%arg0: i32, %arg1: i32) -> (i32, i32, i32, i32) {
    %c0_i32 = arith.constant 0 : i32
    %c0_i32_0 = arith.constant 0 : i32
    %c0_i32_1 = arith.constant 0 : i32
    return %arg0, %arg1, %c0_i32, %c0_i32_0 : i32, i32, i32, i32
  }
  func.func @transform_3(%arg0: i32, %arg1: i32) -> (i32, i32, i32, i32) {
    %c0_i32 = arith.constant 0 : i32
    %c0_i32_0 = arith.constant 0 : i32
    %c0_i32_1 = arith.constant 0 : i32
    return %arg0, %arg1, %c0_i32, %c0_i32_0 : i32, i32, i32, i32
  }
}

</mosaic_0001>

<llo_original>
// kernel: tpu_custom_call.1
$region0: #{tpu_custom_call.1}
  #allocation0 [shape = 'u32[]', space=smem, size = 0x4, offset = 0x4, fixed_abs, tag = 'smem constant byte address 0x4 - core index']
  #allocation1 [shape = 'u32[144,128]{1,0:T(1,128)}', space=vmem, size = 0x12000, scoped, tag = 'internal scratch']
  %s0 = inlined_call_operand.hbm [shape: f32[2,4,2,128], index: 0, kind: input, shape index: {}]
  %s1 = inlined_call_operand.hbm [shape: f32[2,4,2,128], index: 1, kind: input, shape index: {}]
  %s2 = inlined_call_operand.hbm [shape: f32[2,1,1,128], index: 2, kind: output, shape index: {0}]
  %s3 = inlined_call_operand.hbm [shape: f32[2,1,1,128], index: 3, kind: output, shape index: {1}]
  %4 = xla_tuple %s2, %s3
  %s5 = sld [smem:[#allocation0]]
  $region57: #{tpu_custom_call.1} parent=0
    _
  %s7 = ssub.s32 1, %s5
  %s8 = scalar_select 0, %s7, %s5
  $region1: #{tpu_custom_call.1} parent=0
    #allocation2 [shape = 'u8[2048]{0}', space=vmem, size = 0x800, scoped, tag = 'input window, operand 0']
    #allocation3 [shape = 's32[2]{0}', space=sflag, size = 0x8, scoped, tag = 'scoped memory for tpu_custom_call.1']
    #allocation4 [shape = 's32[2]{0}', space=sflag, size = 0x8, scoped, tag = 'scoped memory for tpu_custom_call.1']
    #allocation5 [shape = 'u8[2048]{0}', space=vmem, size = 0x800, scoped, tag = 'input window, operand 1']
    #allocation6 [shape = 's32[2]{0}', space=sflag, size = 0x8, scoped, tag = 'scoped memory for tpu_custom_call.1']
    #allocation7 [shape = 'u8[1024]{0}', space=vmem, size = 0x400, scoped, tag = 'output window, operand 0']
    #allocation8 [shape = 'u8[1024]{0}', space=vmem, size = 0x400, scoped, tag = 'output window, operand 1']
    #allocation9 [shape = 's32[2]{0}', space=sflag, size = 0x8, scoped, tag = 'scoped memory for tpu_custom_call.1']
    %9 = vsyncpa [#allocation3], 0
    %s10 = scalar_lea.sflag [#allocation3], 1
    %11 = vsyncpa %s10, 0
    %12 = vsyncpa [#allocation6], 0
    %s13 = scalar_lea.sflag [#allocation6], 1
    %14 = vsyncpa %s13, 0
    %15 = vsyncpa [#allocation4], 0
    %s16 = scalar_lea.sflag [#allocation4], 1
    %17 = vsyncpa %s16, 0
    %18 = vsyncpa [#allocation9], 0
    %s19 = scalar_lea.sflag [#allocation9], 1
    %20 = vsyncpa %s19, 0
    loop: start=0, step=1, limit=4
    $region2: #{tpu_custom_call.1} parent=1 // loop_pre_header
      _
    $region3: #{tpu_custom_call.1} parent=1 // loop_header
      %s22 = sphi 0, %s26
      %p23 = scmp.ge.s32.totalorder %s22, 4
      %s29 = sphi 0, %s41
      %s30 = sphi 0, %s37
      %s31 = sphi 0, %s29
      %s32 = sphi 0, %s30
      %s33 = sphi 0, %s31
      %s34 = sphi 0, %s32
      %s46 = sphi 0, %s48
      %s49 = sphi 0, %s46
      %s50 = sphi 0, %s49
      %s66 = sphi 0, %s50
      %s74 = sphi 0, %s76
      %s77 = sphi 0, %s74
      %s78 = sphi 0, %s77
      %s94 = sphi 0, %s78
      %s102 = sphi 0, %s104
      %s105 = sphi 0, %s102
      %s106 = sphi 0, %s105
      %s122 = sphi 0, %s106
      %s130 = sphi 0, %s132
      %s133 = sphi 0, %s130
      %s134 = sphi 0, %s133
      %s150 = sphi 0, %s134
    $region4: #{tpu_custom_call.1} parent=1 // loop_header_branch
      %25 = sbr.rel (%p23) target = $region8
    $region5: #{tpu_custom_call.1} parent=1 // loop_body
      %s27 = ssub.s32 %s22, 1
      %s28 = ssub.s32 %s22, 2
      %s35 = sadd.s32 1, %s30
      %p36 = scmp.ge.s32.totalorder %s35, 1
      %s37 = scalar_select %p36, 0, %s35
      %s38 = sadd.s32 1, %s29
      %s39 = scalar_select %p36, %s38, %s29
      %p40 = scmp.ge.s32.totalorder %s39, 2
      %s41 = scalar_select %p40, 0, %s39
      %s42 = ssub.s32 %s29, %s41
      %s43 = ssub.s32 %s30, %s37
      %s44 = sor.u32 %s42, %s43
      %p45 = scmp.eq.s32.totalorder %s44, 0
      %s47 = sadd.s32 %s46, 1
      %s48 = scalar_select %p45, %s46, %s47
      %p51 = pneg %p45
      %p52 = scmp.eq.s32.totalorder %s22, 1
      %p53 = por %p51, %p52
      %p54 = scmp.ne.s32.totalorder %s46, %s49
      %p55 = scmp.eq.s32.totalorder %s22, 0
      %p56 = por %p54, %p55
      %p57 = scmp.ne.s32.totalorder %s46, %s49
      %p58 = scmp.eq.s32.totalorder %s27, 1
      %p59 = por %p57, %p58
      %p60 = scmp.ne.s32.totalorder %s49, %s50
      %p61 = scmp.eq.s32.totalorder %s27, 0
      %p62 = por %p60, %p61
      %p63 = scmp.ne.s32.totalorder %s49, %s50
      %p64 = scmp.eq.s32.totalorder %s28, 1
      %p65 = por %p63, %p64
      %p67 = scmp.ne.s32.totalorder %s50, %s66
      %p68 = scmp.eq.s32.totalorder %s28, 0
      %p69 = por %p67, %p68
      %s70 = ssub.s32 %s29, %s41
      %s71 = ssub.s32 %s30, %s37
      %s72 = sor.u32 %s70, %s71
      %p73 = scmp.eq.s32.totalorder %s72, 0
      %s75 = sadd.s32 %s74, 1
      %s76 = scalar_select %p73, %s74, %s75
      %p79 = pneg %p73
      %p80 = scmp.eq.s32.totalorder %s22, 1
      %p81 = por %p79, %p80
      %p82 = scmp.ne.s32.totalorder %s74, %s77
      %p83 = scmp.eq.s32.totalorder %s22, 0
      %p84 = por %p82, %p83
      %p85 = scmp.ne.s32.totalorder %s74, %s77
      %p86 = scmp.eq.s32.totalorder %s27, 1
      %p87 = por %p85, %p86
      %p88 = scmp.ne.s32.totalorder %s77, %s78
      %p89 = scmp.eq.s32.totalorder %s27, 0
      %p90 = por %p88, %p89
      %p91 = scmp.ne.s32.totalorder %s77, %s78
      %p92 = scmp.eq.s32.totalorder %s28, 1
      %p93 = por %p91, %p92
      %p95 = scmp.ne.s32.totalorder %s78, %s94
      %p96 = scmp.eq.s32.totalorder %s28, 0
      %p97 = por %p95, %p96
      %s98 = ssub.s32 %s29, %s41
      %s99 = ssub.s32 %s30, %s37
      %s100 = sor.u32 %s98, %s99
      %p101 = scmp.eq.s32.totalorder %s100, 0
      %s103 = sadd.s32 %s102, 1
      %s104 = scalar_select %p101, %s102, %s103
      %p107 = pneg %p101
      %p108 = scmp.eq.s32.totalorder %s22, 1
      %p109 = por %p107, %p108
      %p110 = scmp.ne.s32.totalorder %s102, %s105
      %p111 = scmp.eq.s32.totalorder %s22, 0
      %p112 = por %p110, %p111
      %p113 = scmp.ne.s32.totalorder %s102, %s105
      %p114 = scmp.eq.s32.totalorder %s27, 1
      %p115 = por %p113, %p114
      %p116 = scmp.ne.s32.totalorder %s105, %s106
      %p117 = scmp.eq.s32.totalorder %s27, 0
      %p118 = por %p116, %p117
      %p119 = scmp.ne.s32.totalorder %s105, %s106
      %p120 = scmp.eq.s32.totalorder %s28, 1
      %p121 = por %p119, %p120
      %p123 = scmp.ne.s32.totalorder %s106, %s122
      %p124 = scmp.eq.s32.totalorder %s28, 0
      %p125 = por %p123, %p124
      %s126 = ssub.s32 %s29, %s41
      %s127 = ssub.s32 %s30, %s37
      %s128 = sor.u32 %s126, %s127
      %p129 = scmp.eq.s32.totalorder %s128, 0
      %s131 = sadd.s32 %s130, 1
      %s132 = scalar_select %p129, %s130, %s131
      %p135 = pneg %p129
      %p136 = scmp.eq.s32.totalorder %s22, 1
      %p137 = por %p135, %p136
      %p138 = scmp.ne.s32.totalorder %s130, %s133
      %p139 = scmp.eq.s32.totalorder %s22, 0
      %p140 = por %p138, %p139
      %p141 = scmp.ne.s32.totalorder %s130, %s133
      %p142 = scmp.eq.s32.totalorder %s27, 1
      %p143 = por %p141, %p142
      %p144 = scmp.ne.s32.totalorder %s133, %s134
      %p145 = scmp.eq.s32.totalorder %s27, 0
      %p146 = por %p144, %p145
      %p147 = scmp.ne.s32.totalorder %s133, %s134
      %p148 = scmp.eq.s32.totalorder %s28, 1
      %p149 = por %p147, %p148
      %p151 = scmp.ne.s32.totalorder %s134, %s150
      %p152 = scmp.eq.s32.totalorder %s28, 0
      %p153 = por %p151, %p152
      %p154 = scmp.le.s32.totalorder 1, %s22
      %p155 = scmp.lt.s32.totalorder %s22, 3
      %p156 = pnand %p154, %p155
      %p157 = pneg %p156
      // Predicated region
      $region9: #{tpu_custom_call.1} parent=5 // pred_check
        _
      $region10: #{tpu_custom_call.1} parent=5 // pred_check_branch
        %159 = sbr.rel (%p156) target = $region12
      $region11: #{tpu_custom_call.1} parent=5 // pred_region
        %s160 = ssub.s32 %s22, 1
      $region12: #{tpu_custom_call.1} parent=5 // pred_fallthru
        _
      %p161 = scmp.lt.s32.totalorder %s22, 2
      // Predicated region
      $region13: #{tpu_custom_call.1} parent=5 // pred_check
        %p162 = pneg %p161
      $region14: #{tpu_custom_call.1} parent=5 // pred_check_branch
        %164 = sbr.rel (%p162) target = $region16
      $region15: #{tpu_custom_call.1} parent=5 // pred_region
        // Predicated region
        $region17: #{tpu_custom_call.1} parent=15 // pred_check
          %p165 = pneg %p56
        $region18: #{tpu_custom_call.1} parent=15 // pred_check_branch
          %167 = sbr.rel (%p165) target = $region20
        $region19: #{tpu_custom_call.1} parent=15 // pred_region
          %s168 = sand.u32 %s46, 1
          %s169 = scalar_lea.sflag [#allocation3], %s168
          %s170 = sand.u32 %s46, 1
          %s171 = smul.addr %s170, 2
          %s172 = scalar_lea.vmem [#allocation2], %s171
          %s174 = ssub.s32 32, 32
          %175 = vsyncadd %s169, %s174
          %s176 = smul.addr %s29, 4
          %s177 = sadd.s32 %s30, %s176
          %s178 = smul.addr %s177, 32
          %s179 = scalar_lea.hbm %s0, %s178
          %s181 = sshll.u32 %s172, 4
          %s182 = int_to_ptr.vmem [resolvable:$true] %s181
          %184 = dma.hbm_to_vmem [thread:$0]  %s179, 32, %s182, %s169
        $region20: #{tpu_custom_call.1} parent=15 // pred_fallthru
          _
        // Predicated region
        $region21: #{tpu_custom_call.1} parent=15 // pred_check
          %p185 = pneg %p84
        $region22: #{tpu_custom_call.1} parent=15 // pred_check_branch
          %187 = sbr.rel (%p185) target = $region24
        $region23: #{tpu_custom_call.1} parent=15 // pred_region
          %s188 = sand.u32 %s74, 1
          %s189 = scalar_lea.sflag [#allocation6], %s188
          %s190 = sand.u32 %s74, 1
          %s191 = smul.addr %s190, 2
          %s192 = scalar_lea.vmem [#allocation5], %s191
          %s194 = ssub.s32 32, 32
          %195 = vsyncadd %s189, %s194
          %s196 = smul.addr %s29, 4
          %s197 = sadd.s32 %s30, %s196
          %s198 = smul.addr %s197, 32
          %s199 = scalar_lea.hbm %s1, %s198
          %s201 = sshll.u32 %s192, 4
          %s202 = int_to_ptr.vmem [resolvable:$true] %s201
          %204 = dma.hbm_to_vmem [thread:$0]  %s199, 32, %s202, %s189
        $region24: #{tpu_custom_call.1} parent=15 // pred_fallthru
          _
      $region16: #{tpu_custom_call.1} parent=5 // pred_fallthru
        _
      %p205 = scmp.le.s32.totalorder 1, %s22
      %p206 = scmp.lt.s32.totalorder %s22, 3
      %p207 = pnand %p205, %p206
      %p208 = pneg %p207
      // Predicated region
      $region25: #{tpu_custom_call.1} parent=5 // pred_check
        _
      $region26: #{tpu_custom_call.1} parent=5 // pred_check_branch
        %210 = sbr.rel (%p207) target = $region28
      $region27: #{tpu_custom_call.1} parent=5 // pred_region
        %s211 = ssub.s32 %s22, 1
        %s212 = sand.u32 %s49, 1
        %s213 = scalar_lea.sflag [#allocation3], %s212
        %s214 = sand.u32 %s49, 1
        %s215 = smul.addr %s214, 2
        %s216 = scalar_lea.vmem [#allocation2], %s215
        // Predicated region
        $region29: #{tpu_custom_call.1} parent=27 // pred_check
          %p217 = pneg %p62
        $region30: #{tpu_custom_call.1} parent=27 // pred_check_branch
          %219 = sbr.rel (%p217) target = $region32
        $region31: #{tpu_custom_call.1} parent=27 // pred_region
          %220 = dma.done %s213, 32
        $region32: #{tpu_custom_call.1} parent=27 // pred_fallthru
          _
        %s221 = sand.u32 %s77, 1
        %s222 = scalar_lea.sflag [#allocation6], %s221
        %s223 = sand.u32 %s77, 1
        %s224 = smul.addr %s223, 2
        %s225 = scalar_lea.vmem [#allocation5], %s224
        // Predicated region
        $region33: #{tpu_custom_call.1} parent=27 // pred_check
          %p226 = pneg %p90
        $region34: #{tpu_custom_call.1} parent=27 // pred_check_branch
          %228 = sbr.rel (%p226) target = $region36
        $region35: #{tpu_custom_call.1} parent=27 // pred_region
          %229 = dma.done %s222, 32
        $region36: #{tpu_custom_call.1} parent=27 // pred_fallthru
          _
        %s230 = sand.u32 %s49, 1
        %s231 = scalar_lea.sflag [#allocation3], %s230
        %s232 = sand.u32 %s49, 1
        %s233 = smul.addr %s232, 2
        %s234 = scalar_lea.vmem [#allocation2], %s233
        %p235 = pneg %p62
        %p236 = pneg %p59
        %s237 = sand.u32 %s77, 1
        %s238 = scalar_lea.sflag [#allocation6], %s237
        %s239 = sand.u32 %s77, 1
        %s240 = smul.addr %s239, 2
        %s241 = scalar_lea.vmem [#allocation5], %s240
        %p242 = pneg %p90
        %p243 = pneg %p87
        %p244 = pneg %p118
        %p245 = pneg %p115
        %s246 = sand.u32 %s105, 1
        %s247 = scalar_lea.sflag [#allocation4], %s246
        %s248 = sand.u32 %s105, 1
        %s249 = scalar_lea.vmem [#allocation7], %s248
        %p250 = pneg %p146
        %p251 = pneg %p143
        %s252 = sand.u32 %s133, 1
        %s253 = scalar_lea.sflag [#allocation9], %s252
        %s254 = sand.u32 %s133, 1
        %s255 = scalar_lea.vmem [#allocation8], %s254
        %v256 = vld [vmem:[%s216] sm:$0x3]
        %v257 = vld [vmem:[%s225] sm:$0x3]
        %v258 = vsub.f32 %v256, %v257
        %v259 = vmul.f32 %v258, %v258
        %v260 = vlog2.pop %v256
        %v261 = vmul.f32 %v260, 0.6931472
        %v262 = vmax.f32 %v261, -100.0
        %v263 = vsub.f32 1.0, %v256
        %v264 = vlog2.pop %v263
        %v265 = vmul.f32 %v264, 0.6931472
        %v266 = vmax.f32 %v265, -100.0
        %v267 = vmul.f32 %v257, %v262
        %v268 = vsub.f32 1.0, %v257
        %v269 = vmul.f32 %v268, %v266
        %v270 = vadd.f32 %v267, %v269
        %v271 = vsub.f32 0.0, %v270
        %vm272 = vcmask 1041408
        %v273 = vsel %vm272, %v259, 0.0
        %v274 = vrot.slane %v273, 4
        %v275 = vadd.f32 %v273, %v274
        %v276 = vrot.slane %v275, 2
        %v277 = vadd.f32 %v275, %v276
        %v278 = vrot.slane %v277, 1
        %v279 = vadd.f32 %v277, %v278
        %280 = vst [vmem:[%s249] sm:$0x1] %v279
        %v281 = vsel %vm272, %v271, 0.0
        %v282 = vrot.slane %v281, 4
        %v283 = vadd.f32 %v281, %v282
        %v284 = vrot.slane %v283, 2
        %v285 = vadd.f32 %v283, %v284
        %v286 = vrot.slane %v285, 1
        %v287 = vadd.f32 %v285, %v286
        %288 = vst [vmem:[%s255] sm:$0x1] %v287
        %s289 = sand.u32 %s105, 1
        %s290 = scalar_lea.sflag [#allocation4], %s289
        %s291 = sand.u32 %s105, 1
        %s292 = scalar_lea.vmem [#allocation7], %s291
        %s293 = sand.u32 %s133, 1
        %s294 = scalar_lea.sflag [#allocation9], %s293
        %s295 = sand.u32 %s133, 1
        %s296 = scalar_lea.vmem [#allocation8], %s295
        // Predicated region
        $region37: #{tpu_custom_call.1} parent=27 // pred_check
          %p297 = pneg %p115
        $region38: #{tpu_custom_call.1} parent=27 // pred_check_branch
          %299 = sbr.rel (%p297) target = $region40
        $region39: #{tpu_custom_call.1} parent=27 // pred_region
          %s301 = ssub.s32 16, 16
          %302 = vsyncadd %s290, %s301
          %s303 = sadd.s32 %s32, %s31
          %s304 = smul.addr %s303, 16
          %s305 = scalar_lea.hbm %s2, %s304
          %s307 = sshll.u32 %s292, 4
          %s308 = int_to_ptr.vmem [resolvable:$true] %s307
          %310 = dma.vmem_to_hbm [thread:$0]  %s308, 16, %s305, %s290
        $region40: #{tpu_custom_call.1} parent=27 // pred_fallthru
          _
        // Predicated region
        $region41: #{tpu_custom_call.1} parent=27 // pred_check
          %p311 = pneg %p143
        $region42: #{tpu_custom_call.1} parent=27 // pred_check_branch
          %313 = sbr.rel (%p311) target = $region44
        $region43: #{tpu_custom_call.1} parent=27 // pred_region
          %s315 = ssub.s32 16, 16
          %316 = vsyncadd %s294, %s315
          %s317 = sadd.s32 %s32, %s31
          %s318 = smul.addr %s317, 16
          %s319 = scalar_lea.hbm %s3, %s318
          %s321 = sshll.u32 %s296, 4
          %s322 = int_to_ptr.vmem [resolvable:$true] %s321
          %324 = dma.vmem_to_hbm [thread:$0]  %s322, 16, %s319, %s294
        $region44: #{tpu_custom_call.1} parent=27 // pred_fallthru
          _
      $region28: #{tpu_custom_call.1} parent=5 // pred_fallthru
        _
      %p325 = scmp.le.s32.totalorder 2, %s22
      // Predicated region
      $region45: #{tpu_custom_call.1} parent=5 // pred_check
        %p326 = pneg %p325
      $region46: #{tpu_custom_call.1} parent=5 // pred_check_branch
        %328 = sbr.rel (%p326) target = $region48
      $region47: #{tpu_custom_call.1} parent=5 // pred_region
        %s329 = ssub.s32 %s22, 2
        // Predicated region
        $region49: #{tpu_custom_call.1} parent=47 // pred_check
          %p330 = pneg %p121
        $region50: #{tpu_custom_call.1} parent=47 // pred_check_branch
          %332 = sbr.rel (%p330) target = $region52
        $region51: #{tpu_custom_call.1} parent=47 // pred_region
          %s333 = sand.u32 %s106, 1
          %s334 = scalar_lea.sflag [#allocation4], %s333
          %s335 = sand.u32 %s106, 1
          %s336 = scalar_lea.vmem [#allocation7], %s335
          %337 = dma.done %s334, 16
        $region52: #{tpu_custom_call.1} parent=47 // pred_fallthru
          _
        // Predicated region
        $region53: #{tpu_custom_call.1} parent=47 // pred_check
          %p338 = pneg %p149
        $region54: #{tpu_custom_call.1} parent=47 // pred_check_branch
          %340 = sbr.rel (%p338) target = $region56
        $region55: #{tpu_custom_call.1} parent=47 // pred_region
          %s341 = sand.u32 %s134, 1
          %s342 = scalar_lea.sflag [#allocation9], %s341
          %s343 = sand.u32 %s134, 1
          %s344 = scalar_lea.vmem [#allocation8], %s343
          %345 = dma.done %s342, 16
        $region56: #{tpu_custom_call.1} parent=47 // pred_fallthru
          _
      $region48: #{tpu_custom_call.1} parent=5 // pred_fallthru
        _
    $region6: #{tpu_custom_call.1} parent=1 // loop_footer
      %s26 = sadd.s32 1, %s22
    $region7: #{tpu_custom_call.1} parent=1 // loop_footer_branch
      %21 = sbr.rel target = $region3
    $region8: #{tpu_custom_call.1} parent=1 // loop_exit
      _
    %346 = vsyncpa [#allocation3], 1
    %s347 = scalar_lea.sflag [#allocation3], 1
    %348 = vsyncpa %s347, 1
    %349 = vsyncpa [#allocation6], 1
    %s350 = scalar_lea.sflag [#allocation6], 1
    %351 = vsyncpa %s350, 1
    %352 = vsyncpa [#allocation4], 1
    %s353 = scalar_lea.sflag [#allocation4], 1
    %354 = vsyncpa %s353, 1
    %355 = vsyncpa [#allocation9], 1
    %s356 = scalar_lea.sflag [#allocation9], 1
    %357 = vsyncpa %s356, 1

</llo_original>
